<compile_context>
chip_gen: v7x
topology: tpu7x:2x2x1
jax: 0.10.0
libtpu: 0.0.40
codegen_flags: <defaults>
</compile_context>

<pallas_src>
import jax
import jax.numpy as jnp
from jax.experimental import pallas as pl
from jax.experimental.pallas import tpu as pltpu


def _round_up(x: int, m: int) -> int:
    return ((x + m - 1) // m) * m


# --------------------------------------------------------------------------
# One-time parameter prep (do this ONCE, outside the training/serving loop).
# --------------------------------------------------------------------------
def prepare_encoder_params(w1, b1, wmu, bmu, wvar, bvar):
    """Fuse mu/var heads, pad feature dims to 128 lanes, cast W1 to bf16.

    Returns (prepped_params, meta) where prepped_params is a tuple of arrays
    to pass to `encoder_forward` and meta holds the static dims.
    """
    Din, H = w1.shape
    L = wmu.shape[1]
    O = 2 * L
    H_p = _round_up(H, 128)
    O_p = _round_up(O, 128)

    w_head = jnp.concatenate([wmu, wvar], axis=1)                 # [H, 2L]
    b_head = jnp.concatenate([bmu, bvar], axis=1)                 # [1, 2L]

    # W1: bf16 for the big (streamed-x) matmul; head kept in f32 (tiny, and
    # log_var accuracy matters for the downstream exp()).
    w1p = jnp.pad(w1, ((0, 0), (0, H_p - H))).astype(jnp.bfloat16)        # [Din, H_p]
    b1p = jnp.pad(b1, ((0, 0), (0, H_p - H))).astype(jnp.float32)         # [1, H_p]
    whp = jnp.pad(w_head, ((0, H_p - H), (0, O_p - O))).astype(jnp.float32)  # [H_p, O_p]
    bhp = jnp.pad(b_head, ((0, 0), (0, O_p - O))).astype(jnp.float32)        # [1, O_p]

    meta = dict(Din=Din, H=H, L=L, O=O, H_p=H_p, O_p=O_p)
    return (w1p, b1p, whp, bhp), meta


# --------------------------------------------------------------------------
# Kernel
# --------------------------------------------------------------------------
def encoder_kernel(x_ref, w1_ref, b1_ref, wh_ref, bh_ref, out_ref):
    # x_ref:  [TB, Din]   f32   (streamed batch tile; cast to bf16 in-kernel)
    # w1_ref: [Din, H_p]  bf16  (VMEM-resident across all grid steps)
    # b1_ref: [1, H_p]    f32
    # wh_ref: [H_p, O_p]  f32   (fused mu|var head weights)
    # bh_ref: [1, O_p]    f32
    # out_ref:[TB, O_p]   f32   (fused mean|log_var output slab)
    x_bf16 = x_ref[...].astype(jnp.bfloat16)
    h = jnp.dot(x_bf16, w1_ref[...], preferred_element_type=jnp.float32)
    h = jnp.maximum(h + b1_ref[...], 0.0)                         # f32 ReLU epilogue

    # Head matmul in f32: tiny relative to the first matmul, keeps log_var tight.
    out = jnp.dot(h, wh_ref[...], preferred_element_type=jnp.float32)
    out_ref[...] = (out + bh_ref[...]).astype(out_ref.dtype)


# --------------------------------------------------------------------------
# Wrapper
# --------------------------------------------------------------------------
def encoder_forward(x, prepped, meta, *, batch_tile=256):
    """x: [B, input_dim + n_classes] float32; prepped/meta from prepare_encoder_params.

    Returns (mean, log_var), each [B, latent_dim] float32.
    """
    w1p, b1p, whp, bhp = prepped
    B, Din = x.shape
    assert Din == meta["Din"], "feature dim mismatch with prepared params"
    H_p, O_p, L, O = meta["H_p"], meta["O_p"], meta["L"], meta["O"]

    # ---- Batch tile: aim for >=2 grid steps so both v7x TensorCores get work. ----
    if B <= 16:
        TB = _round_up(max(B, 8), 8)
    else:
        TB = min(batch_tile, _round_up(pl.cdiv(B, 2), 16))

    # ---- VMEM budget (conservative; fits v5e scoped default after raise,
    #      v6e, and v7x's 64 MiB physical). Shrink TB if needed. ----
    def vmem_need(tb):
        resident = 2 * (w1p.size * 2 + b1p.size * 4 + whp.size * 4 + bhp.size * 4)
        streamed = 2 * tb * Din * 4 + 2 * tb * O_p * 4            # double-buffered x / out
        interm = tb * H_p * 4                                     # f32 hidden
        return resident + streamed + interm

    budget = 48 << 20
    while vmem_need(TB) > budget and TB > 64:
        TB = max(64, TB // 2)
    # TODO(synk): for very large H, additionally chunk the hidden dim inside the
    # kernel (fori_loop over H blocks) to cap the f32 intermediate footprint.

    B_p = _round_up(B, TB)
    xp = jnp.pad(x, ((0, B_p - B), (0, 0))) if B_p != B else x    # batch pad only, no dtype round-trip
    grid = (B_p // TB,)

    flops = 2 * B_p * (Din * H_p + H_p * O_p)
    bytes_accessed = (xp.size * 4 + w1p.size * 2 + whp.size * 4 +
                      b1p.size * 4 + bhp.size * 4 + B_p * O_p * 4)
    cost = pl.CostEstimate(flops=flops, transcendentals=0,
                           bytes_accessed=bytes_accessed)

    out = pl.pallas_call(
        encoder_kernel,
        out_shape=jax.ShapeDtypeStruct((B_p, O_p), jnp.float32),
        grid=grid,
        in_specs=[
            pl.BlockSpec((TB, Din), lambda i: (i, 0)),     # x tile (streamed, pipelined)
            pl.BlockSpec((Din, H_p), lambda i: (0, 0)),    # w1 resident
            pl.BlockSpec((1, H_p), lambda i: (0, 0)),      # b1 resident
            pl.BlockSpec((H_p, O_p), lambda i: (0, 0)),    # fused head W resident
            pl.BlockSpec((1, O_p), lambda i: (0, 0)),      # fused head b resident
        ],
        out_specs=pl.BlockSpec((TB, O_p), lambda i: (i, 0)),   # lane-dense output slab
        compiler_params=pltpu.CompilerParams(
            dimension_semantics=("parallel",),
            vmem_limit_bytes=int(min(max(2 * vmem_need(TB), 32 << 20), 64 << 20)),
        ),
        cost_estimate=cost,
    )(xp, w1p, b1p, whp, bhp)

    out = out[:B, :O]
    mean = out[:, :L]
    log_var = out[:, L:O]
    return mean, log_var


def init_linear(key, fan_in, fan_out):
    """PyTorch nn.Linear-style uniform(-1/sqrt(fan_in), 1/sqrt(fan_in)) init.

    Returns W of shape [fan_in, fan_out] (transposed vs. torch) and b of shape [1, fan_out].
    """
    kw, kb = jax.random.split(key)
    bound = 1.0 / jnp.sqrt(fan_in)
    w = jax.random.uniform(kw, (fan_in, fan_out), jnp.float32, -bound, bound)
    b = jax.random.uniform(kb, (1, fan_out), jnp.float32, -bound, bound)
    return w, b


if __name__ == "__main__":
    # Small, forward-consistent shapes:
    #   input_dim=32, n_classes=8  ->  x has 40 features
    #   hidden_dim=32, latent_dim=16, batch=8
    input_dim, n_classes, hidden_dim, latent_dim, batch = 32, 8, 32, 16, 8

    key = jax.random.PRNGKey(0)
    k_x, k_l1, k_mu, k_var = jax.random.split(key, 4)

    x = jax.random.normal(k_x, (batch, input_dim + n_classes), jnp.float32)

    w1, b1 = init_linear(k_l1, input_dim + n_classes, hidden_dim)
    wmu, bmu = init_linear(k_mu, hidden_dim, latent_dim)
    wvar, bvar = init_linear(k_var, hidden_dim, latent_dim)

    # One-time prep (hoisted out of the forward path).
    prepped, meta = prepare_encoder_params(w1, b1, wmu, bmu, wvar, bvar)

    # Jit the forward so wrapper-side pad/slice fuse with the caller's graph.
    fwd = jax.jit(lambda xx, pp: encoder_forward(xx, pp, meta))
    mean, log_var = fwd(x, prepped)
    jax.block_until_ready((mean, log_var))

    # Reference check in plain JAX f32 (same math as the PyTorch module).
    # First matmul runs in bf16 (f32 accumulate); head matmul is f32.
    h_ref = jnp.maximum(x @ w1 + b1, 0.0)
    mean_ref = h_ref @ wmu + bmu
    logvar_ref = h_ref @ wvar + bvar
    assert mean.shape == (batch, latent_dim) and log_var.shape == (batch, latent_dim)
    assert jnp.allclose(mean, mean_ref, atol=1e-2, rtol=1e-2), "mean mismatch"
    assert jnp.allclose(log_var, logvar_ref, atol=1e-2, rtol=1e-2), "log_var mismatch"

    print("KERNEL_OK")
</pallas_src>

<mosaic_0001>
module attributes {stable_mosaic.version = 11 : i64} {
  func.func @encoder_kernel(%arg0: i32, %arg1: memref<8x40xf32, #tpu.memory_space<vmem>>, %arg2: memref<40x128xbf16, #tpu.memory_space<vmem>>, %arg3: memref<1x128xf32, #tpu.memory_space<vmem>>, %arg4: memref<128x128xf32, #tpu.memory_space<vmem>>, %arg5: memref<1x128xf32, #tpu.memory_space<vmem>>, %arg6: memref<8x128xf32, #tpu.memory_space<vmem>>) attributes {dimension_semantics = [#tpu.dimension_semantics<parallel>], iteration_bounds = array<i64: 1>, scalar_prefetch = 0 : i64, scratch_operands = 0 : i64, tpu.core_type = #tpu.core_type<tc>, window_params = [{transform_indices = @transform_0, window_bounds = array<i64: 8, 40>}, {pipeline_mode = #tpu.pipeline_mode<synchronous>, transform_indices = @transform_1, window_bounds = array<i64: 40, 128>}, {pipeline_mode = #tpu.pipeline_mode<synchronous>, transform_indices = @transform_2, window_bounds = array<i64: 1, 128>}, {pipeline_mode = #tpu.pipeline_mode<synchronous>, transform_indices = @transform_3, window_bounds = array<i64: 128, 128>}, {pipeline_mode = #tpu.pipeline_mode<synchronous>, transform_indices = @transform_4, window_bounds = array<i64: 1, 128>}, {transform_indices = @transform_5, window_bounds = array<i64: 8, 128>}]} {
    %c0 = arith.constant 0 : index
    %c0_0 = arith.constant 0 : index
    %0 = vector.load %arg1[%c0, %c0_0] : memref<8x40xf32, #tpu.memory_space<vmem>>, vector<8x40xf32>
    %1 = arith.truncf %0 : vector<8x40xf32> to vector<8x40xbf16>
    %c0_1 = arith.constant 0 : index
    %c0_2 = arith.constant 0 : index
    %2 = vector.load %arg2[%c0_1, %c0_2] : memref<40x128xbf16, #tpu.memory_space<vmem>>, vector<40x128xbf16>
    %cst = arith.constant dense<0.000000e+00> : vector<8x128xf32>
    %3 = tpu.matmul %1, %2, %cst {dimension_numbers = #tpu.dot_dimension_numbers<[1], [0], [0], [1], [0, 0, 1, 1], [], []>} : vector<8x40xbf16>, vector<40x128xbf16>, vector<8x128xf32> -> vector<8x128xf32>
    %c0_3 = arith.constant 0 : index
    %c0_4 = arith.constant 0 : index
    %4 = vector.load %arg3[%c0_3, %c0_4] : memref<1x128xf32, #tpu.memory_space<vmem>>, vector<1x128xf32>
    %5 = vector.broadcast %4 : vector<1x128xf32> to vector<8x128xf32>
    %6 = arith.addf %3, %5 : vector<8x128xf32>
    %cst_5 = arith.constant 0.000000e+00 : f32
    %7 = vector.broadcast %cst_5 : f32 to vector<8x128xf32>
    %8 = arith.maximumf %6, %7 : vector<8x128xf32>
    %c0_6 = arith.constant 0 : index
    %c0_7 = arith.constant 0 : index
    %9 = vector.load %arg4[%c0_6, %c0_7] : memref<128x128xf32, #tpu.memory_space<vmem>>, vector<128x128xf32>
    %cst_8 = arith.constant dense<0.000000e+00> : vector<8x128xf32>
    %10 = tpu.matmul %8, %9, %cst_8 {dimension_numbers = #tpu.dot_dimension_numbers<[1], [0], [0], [1], [0, 0, 1, 1], [], []>} : vector<8x128xf32>, vector<128x128xf32>, vector<8x128xf32> -> vector<8x128xf32>
    %c0_9 = arith.constant 0 : index
    %c0_10 = arith.constant 0 : index
    %11 = vector.load %arg5[%c0_9, %c0_10] : memref<1x128xf32, #tpu.memory_space<vmem>>, vector<1x128xf32>
    %12 = vector.broadcast %11 : vector<1x128xf32> to vector<8x128xf32>
    %13 = arith.addf %10, %12 : vector<8x128xf32>
    %c0_11 = arith.constant 0 : index
    %c0_12 = arith.constant 0 : index
    %14 = vector.load %arg6[%c0_11, %c0_12] : memref<8x128xf32, #tpu.memory_space<vmem>>, vector<8x128xf32>
    tpu.vector_store %arg6[%c0_11, %c0_12], %13 {strides = array<i32>} : memref<8x128xf32, #tpu.memory_space<vmem>>, vector<8x128xf32>,
    return
  }
  func.func @transform_0(%arg0: i32) -> (i32, i32) {
    %c0_i32 = arith.constant 0 : i32
    %c0_i32_0 = arith.constant 0 : i32
    return %arg0, %c0_i32 : i32, i32
  }
  func.func @transform_1(%arg0: i32) -> (i32, i32) {
    %c0_i32 = arith.constant 0 : i32
    %c0_i32_0 = arith.constant 0 : i32
    %c0_i32_1 = arith.constant 0 : i32
    return %c0_i32, %c0_i32_0 : i32, i32
  }
  func.func @transform_2(%arg0: i32) -> (i32, i32) {
    %c0_i32 = arith.constant 0 : i32
    %c0_i32_0 = arith.constant 0 : i32
    %c0_i32_1 = arith.constant 0 : i32
    return %c0_i32, %c0_i32_0 : i32, i32
  }
  func.func @transform_3(%arg0: i32) -> (i32, i32) {
    %c0_i32 = arith.constant 0 : i32
    %c0_i32_0 = arith.constant 0 : i32
    %c0_i32_1 = arith.constant 0 : i32
    return %c0_i32, %c0_i32_0 : i32, i32
  }
  func.func @transform_4(%arg0: i32) -> (i32, i32) {
    %c0_i32 = arith.constant 0 : i32
    %c0_i32_0 = arith.constant 0 : i32
    %c0_i32_1 = arith.constant 0 : i32
    return %c0_i32, %c0_i32_0 : i32, i32
  }
  func.func @transform_5(%arg0: i32) -> (i32, i32) {
    %c0_i32 = arith.constant 0 : i32
    %c0_i32_0 = arith.constant 0 : i32
    return %arg0, %c0_i32 : i32, i32
  }
}

</mosaic_0001>

<llo_original>
// kernel: _lambda_.1
$region0: #{_lambda_.1}
  #allocation0 [shape = 'u32[]', space=smem, size = 0x4, offset = 0x4, fixed_abs, tag = 'smem constant byte address 0x4 - core index']
  #allocation1 [shape = 'u32[144,128]{1,0:T(1,128)}', space=vmem, size = 0x12000, scoped, tag = 'internal scratch']
  %s0 = inlined_call_operand.hbm [shape: f32[8,40], index: 0, kind: input, shape index: {}]
  %s1 = inlined_call_operand.hbm [shape: bf16[40,128], index: 1, kind: input, shape index: {}]
  %s2 = inlined_call_operand.vmem [shape: f32[1,128], index: 2, kind: input, shape index: {}]
  %s3 = inlined_call_operand.hbm [shape: f32[128,128], index: 3, kind: input, shape index: {}]
  %s4 = inlined_call_operand.vmem [shape: f32[1,128], index: 4, kind: input, shape index: {}]
  %s5 = inlined_call_operand.vmem [shape: f32[8,128], index: 5, kind: output, shape index: {}]
  %s6 = sld [smem:[#allocation0]]
  $region42: #{_lambda_.1} parent=0
    _
  %s8 = ssub.s32 1, %s6
  %s9 = scalar_select 0, %s8, %s6
  $region1: #{_lambda_.1} parent=0
    #allocation2 [shape = 'u8[4096]{0}', space=vmem, size = 0x1000, scoped, tag = 'input window, operand 0, single buffered']
    #allocation3 [shape = 's32[1]{0}', space=sflag, size = 0x4, scoped, tag = 'scoped memory for _lambda_.1']
    #allocation4 [shape = 'u8[10240]{0}', space=vmem, size = 0x2800, scoped, tag = 'input window, operand 1, single buffered']
    #allocation5 [shape = 's32[1]{0}', space=sflag, size = 0x4, scoped, tag = 'scoped memory for _lambda_.1']
    #allocation6 [shape = 'u8[65536]{0}', space=vmem, size = 0x10000, scoped, tag = 'input window, operand 3, single buffered']
    %10 = vsyncpa [#allocation3], 0
    %11 = vsyncpa [#allocation5], 0
    // Predicated region
    $region2: #{_lambda_.1} parent=1 // pred_check
      _
    $region3: #{_lambda_.1} parent=1 // pred_check_branch
      %13 = sbr.rel (0) target = $region5
    $region4: #{_lambda_.1} parent=1 // pred_region
      %s15 = ssub.s32 128, 128
      %16 = vsyncadd [#allocation3], %s15
      %s18 = sshll.u32 [#allocation2], 4
      %s19 = int_to_ptr.vmem [resolvable:$true] %s18
      %21 = dma.hbm_to_vmem [thread:$0]  %s0, 128, %s19, [#allocation3]
    $region5: #{_lambda_.1} parent=1 // pred_fallthru
      _
    // Predicated region
    $region6: #{_lambda_.1} parent=1 // pred_check
      _
    $region7: #{_lambda_.1} parent=1 // pred_check_branch
      %23 = sbr.rel (0) target = $region9
    $region8: #{_lambda_.1} parent=1 // pred_region
      %s25 = ssub.s32 320, 320
      %26 = vsyncadd [#allocation5], %s25
      %s27 = sshll.u32 [#allocation4], 4
      %s28 = int_to_ptr.vmem [resolvable:$true] %s27
      %33 = dma.hbm_to_vmem [thread:$0]  %s1, 320, %s28, [#allocation5], 64, 64, 4
    $region9: #{_lambda_.1} parent=1 // pred_fallthru
      _
    // Predicated region
    $region10: #{_lambda_.1} parent=1 // pred_check
      _
    $region11: #{_lambda_.1} parent=1 // pred_check_branch
      %35 = sbr.rel (0) target = $region13
    $region12: #{_lambda_.1} parent=1 // pred_region
      _
    $region13: #{_lambda_.1} parent=1 // pred_fallthru
      _
    // Predicated region
    $region14: #{_lambda_.1} parent=1 // pred_check
      _
    $region15: #{_lambda_.1} parent=1 // pred_check_branch
      %37 = sbr.rel (0) target = $region17
    $region16: #{_lambda_.1} parent=1 // pred_region
      %s39 = ssub.s32 2048, 2048
      %40 = vsyncadd [#allocation5], %s39
      %s41 = sshll.u32 [#allocation6], 4
      %s42 = int_to_ptr.vmem [resolvable:$true] %s41
      %47 = dma.hbm_to_vmem [thread:$0]  %s3, 2048, %s42, [#allocation5], 128, 128, 8
    $region17: #{_lambda_.1} parent=1 // pred_fallthru
      _
    // Predicated region
    $region18: #{_lambda_.1} parent=1 // pred_check
      _
    $region19: #{_lambda_.1} parent=1 // pred_check_branch
      %49 = sbr.rel (0) target = $region21
    $region20: #{_lambda_.1} parent=1 // pred_region
      _
    $region21: #{_lambda_.1} parent=1 // pred_fallthru
      _
    // Predicated region
    $region22: #{_lambda_.1} parent=1 // pred_check
      _
    $region23: #{_lambda_.1} parent=1 // pred_check_branch
      %51 = sbr.rel (0) target = $region25
    $region24: #{_lambda_.1} parent=1 // pred_region
      %52 = dma.done [#allocation3], 128
    $region25: #{_lambda_.1} parent=1 // pred_fallthru
      _
    // Predicated region
    $region26: #{_lambda_.1} parent=1 // pred_check
      _
    $region27: #{_lambda_.1} parent=1 // pred_check_branch
      %54 = sbr.rel (0) target = $region29
    $region28: #{_lambda_.1} parent=1 // pred_region
      %55 = dma.done [#allocation5], 320
    $region29: #{_lambda_.1} parent=1 // pred_fallthru
      _
    // Predicated region
    $region30: #{_lambda_.1} parent=1 // pred_check
      _
    $region31: #{_lambda_.1} parent=1 // pred_check_branch
      %57 = sbr.rel (0) target = $region33
    $region32: #{_lambda_.1} parent=1 // pred_region
      %58 = dma.done [#allocation5], 2048
    $region33: #{_lambda_.1} parent=1 // pred_fallthru
      _
    %v60 = vld [vmem:[#allocation2] sm:$0xff]
    %v61 = vpack.c.bf16 %v60, %v60
    %v62 = vld [vmem:[#allocation4] sm:$0xf]
    %v63 = vld [vmem:[#allocation4 + $0x4] sm:$0xf]
    %v64 = vld [vmem:[#allocation4 + $0x8] sm:$0xf]
    %v65 = vld [vmem:[#allocation4 + $0xc] sm:$0xf]
    %v66 = vld [vmem:[#allocation4 + $0x10] sm:$0xf]
    %v67 = vld [vmem:[%s2] sm:$0x1]
    %v69 = vlaneseq
    %v70 = vshrl.u32 %v69, 7
    %v71 = vsub.s32 0, %v70
    %v72 = vrot.slane %v67, %v71
    %v79 = vunpack.c.l.b16 %v62
    %v80 = vunpack.c.l.b16 %v63
    %v81 = vunpack.c.l.b16 %v64
    %v82 = vunpack.c.l.b16 %v65
    %v83 = vunpack.c.l.b16 %v66
    %v84 = vpack.c.b16 %v80, %v79
    %v85 = vpack.c.b16 %v82, %v81
    %v86 = vpack.c.b16 %v83, %v83
    %vm89 = vcmask 326656
    %v91 = vsel %vm89, %v61, 0
    %vm93 = vcmask 1043456
    %v95 = vsel %vm93, %v86, 0
    %97 = vmatprep.subr.bf16.mxu0 0
    %98 = vmatpush1.bf16.msra.mxu0 %v84
    %99 = vmatprep.subr.bf16.mxu0 0
    %100 = vmatpush1.bf16.msra.mxu0 %v85
    %101 = vmatprep.subr.bf16.mxu0 0
    %102 = vmatpush1.bf16.msra.mxu0 %v95
    %103 = vmatprep.subr.bf16.mxu0 0
    %104 = vmatpush1.bf16.msra.mxu0 0
    %105 = vmatprep.subr.bf16.mxu0 0
    %106 = vmatpush1.bf16.msra.mxu0 0
    %107 = vmatprep.subr.bf16.mxu0 0
    %108 = vmatpush1.bf16.msra.mxu0 0
    %109 = vmatprep.subr.bf16.mxu0 0
    %110 = vmatpush1.bf16.msra.mxu0 0
    %111 = vmatprep.subr.bf16.mxu0 0
    %112 = vmatpush1.bf16.msra.mxu0 0
    %113 = vmatprep.subr.bf16.mxu0 0
    %114 = vmatpush1.bf16.msra.mxu0 0
    %115 = vmatprep.subr.bf16.mxu0 0
    %116 = vmatpush1.bf16.msra.mxu0 0
    %117 = vmatprep.subr.bf16.mxu0 0
    %118 = vmatpush1.bf16.msra.mxu0 0
    %119 = vmatprep.subr.bf16.mxu0 0
    %120 = vmatpush1.bf16.msra.mxu0 0
    %121 = vmatprep.subr.bf16.mxu0 0
    %122 = vmatpush1.bf16.msra.mxu0 0
    %123 = vmatprep.subr.bf16.mxu0 0
    %124 = vmatpush1.bf16.msra.mxu0 0
    %125 = vmatprep.subr.bf16.mxu0 0
    %126 = vmatpush1.bf16.msra.mxu0 0
    %127 = vmatprep.subr.bf16.mxu0 0
    %128 = vmatpush1.bf16.msra.mxu0 0
    %129 = vmatprep.mubr.bf16.mxu0 0
    %130 = vmatmul.mubr.bf16.gmra.mrb[0].mxu0 %v91
    %v131 = vpop.f32.mrb[0].mxu0
    %v132 = vadd.f32 %v72, %v131
    %v133 = vpop.f32.mrb[0].mxu0
    %v134 = vpop.f32.mrb[0].mxu0
    %v135 = vpop.f32.mrb[0].mxu0
    %136 = vdwg.mxu0
    %v137 = vmax.f32 %v132, 0.0
    %v138 = vld [vmem:[#allocation6] sm:$0xff]
    %v139 = vld [vmem:[#allocation6 + $0x8] sm:$0xff]
    %v140 = vld [vmem:[#allocation6 + $0x10] sm:$0xff]
    %v141 = vld [vmem:[#allocation6 + $0x18] sm:$0xff]
    %v142 = vld [vmem:[#allocation6 + $0x20] sm:$0xff]
    %v143 = vld [vmem:[#allocation6 + $0x28] sm:$0xff]
    %v144 = vld [vmem:[#allocation6 + $0x30] sm:$0xff]
    %v145 = vld [vmem:[#allocation6 + $0x38] sm:$0xff]
    %v146 = vld [vmem:[#allocation6 + $0x40] sm:$0xff]
    %v147 = vld [vmem:[#allocation6 + $0x48] sm:$0xff]
    %v148 = vld [vmem:[#allocation6 + $0x50] sm:$0xff]
    %v149 = vld [vmem:[#allocation6 + $0x58] sm:$0xff]
    %v150 = vld [vmem:[#allocation6 + $0x60] sm:$0xff]
    %v151 = vld [vmem:[#allocation6 + $0x68] sm:$0xff]
    %v152 = vld [vmem:[#allocation6 + $0x70] sm:$0xff]
    %v153 = vld [vmem:[#allocation6 + $0x78] sm:$0xff]
    %v154 = vld [vmem:[%s4] sm:$0x1]
    %v156 = vlaneseq
    %v157 = vshrl.u32 %v156, 7
    %v158 = vsub.s32 0, %v157
    %v159 = vrot.slane %v154, %v158
    %161 = vmatprep.subr.mxu0 0.0
    %162 = vmatpush1.msra.mxu0 %v138
    %163 = vmatprep.subr.mxu0 0.0
    %164 = vmatpush1.msra.mxu0 %v139
    %165 = vmatprep.subr.mxu0 0.0
    %166 = vmatpush1.msra.mxu0 %v140
    %167 = vmatprep.subr.mxu0 0.0
    %168 = vmatpush1.msra.mxu0 %v141
    %169 = vmatprep.subr.mxu0 0.0
    %170 = vmatpush1.msra.mxu0 %v142
    %171 = vmatprep.subr.mxu0 0.0
    %172 = vmatpush1.msra.mxu0 %v143
    %173 = vmatprep.subr.mxu0 0.0
    %174 = vmatpush1.msra.mxu0 %v144
    %175 = vmatprep.subr.mxu0 0.0
    %176 = vmatpush1.msra.mxu0 %v145
    %177 = vmatprep.subr.mxu0 0.0
    %178 = vmatpush1.msra.mxu0 %v146
    %179 = vmatprep.subr.mxu0 0.0
    %180 = vmatpush1.msra.mxu0 %v147
    %181 = vmatprep.subr.mxu0 0.0
    %182 = vmatpush1.msra.mxu0 %v148
    %183 = vmatprep.subr.mxu0 0.0
    %184 = vmatpush1.msra.mxu0 %v149
    %185 = vmatprep.subr.mxu0 0.0
    %186 = vmatpush1.msra.mxu0 %v150
    %187 = vmatprep.subr.mxu0 0.0
    %188 = vmatpush1.msra.mxu0 %v151
    %189 = vmatprep.subr.mxu0 0.0
    %190 = vmatpush1.msra.mxu0 %v152
    %191 = vmatprep.subr.mxu0 0.0
    %192 = vmatpush1.msra.mxu0 %v153
    %193 = vmatprep.subr.mxu0 0.0
    %194 = vmatpush1.msra.mxu0 0.0
    %195 = vmatprep.subr.mxu0 0.0
    %196 = vmatpush1.msra.mxu0 0.0
    %197 = vmatprep.subr.mxu0 0.0
    %198 = vmatpush1.msra.mxu0 0.0
    %199 = vmatprep.subr.mxu0 0.0
    %200 = vmatpush1.msra.mxu0 0.0
    %201 = vmatprep.subr.mxu0 0.0
    %202 = vmatpush1.msra.mxu0 0.0
    %203 = vmatprep.subr.mxu0 0.0
    %204 = vmatpush1.msra.mxu0 0.0
    %205 = vmatprep.subr.mxu0 0.0
    %206 = vmatpush1.msra.mxu0 0.0
    %207 = vmatprep.subr.mxu0 0.0
    %208 = vmatpush1.msra.mxu0 0.0
    %209 = vmatprep.subr.mxu0 0.0
    %210 = vmatpush1.msra.mxu0 0.0
    %211 = vmatprep.subr.mxu0 0.0
    %212 = vmatpush1.msra.mxu0 0.0
    %213 = vmatprep.subr.mxu0 0.0
    %214 = vmatpush1.msra.mxu0 0.0
    %215 = vmatprep.subr.mxu0 0.0
    %216 = vmatpush1.msra.mxu0 0.0
    %217 = vmatprep.subr.mxu0 0.0
    %218 = vmatpush1.msra.mxu0 0.0
    %219 = vmatprep.subr.mxu0 0.0
    %220 = vmatpush1.msra.mxu0 0.0
    %221 = vmatprep.subr.mxu0 0.0
    %222 = vmatpush1.msra.mxu0 0.0
    %223 = vmatprep.subr.mxu0 0.0
    %224 = vmatpush1.msra.mxu0 0.0
    %225 = vmatprep.mubr.f32.mxu0 0.0
    %226 = vmatmul.mubr.f32.gmra.mrb[0].mxu0 %v137
    %v227 = vpop.f32.mrb[0].mxu0
    %v228 = vadd.f32 %v159, %v227
    %v229 = vpop.f32.mrb[0].mxu0
    %230 = vdwg.mxu0
    %231 = vst [vmem:[%s5] sm:$0xff] %v228
    // Predicated region
    $region34: #{_lambda_.1} parent=1 // pred_check
      _
    $region35: #{_lambda_.1} parent=1 // pred_check_branch
      %233 = sbr.rel (0) target = $region37
    $region36: #{_lambda_.1} parent=1 // pred_region
      _
    $region37: #{_lambda_.1} parent=1 // pred_fallthru
      _
    // Predicated region
    $region38: #{_lambda_.1} parent=1 // pred_check
      _
    $region39: #{_lambda_.1} parent=1 // pred_check_branch
      %235 = sbr.rel (0) target = $region41
    $region40: #{_lambda_.1} parent=1 // pred_region
      _
    $region41: #{_lambda_.1} parent=1 // pred_fallthru
      _
    %236 = vsyncpa [#allocation3], 1
    %237 = vsyncpa [#allocation5], 1

</llo_original>
